<compile_context>
chip_gen: v5e
topology: v5e:2x2
jax: 0.10.0
libtpu: 0.0.40
codegen_flags: <defaults>
</compile_context>

<pallas_src>
import jax
import jax.numpy as jnp
from jax import lax
from jax.experimental import pallas as pl
from jax.experimental.pallas import tpu as pltpu

# Contract last dim of lhs with last dim of rhs (A @ B^T), as in flash attention.
_TRANS_B_DIM_NUMBERS = (((1,), (1,)), ((), ()))


def critic_kernel(x_ref, w1_ref, b1_ref, w2_ref, b2_ref, w3_ref, b3_ref, o_ref):
    # Layer 1: (TILE_B, F) @ (F, 50) -- bf16 MXU operands, f32 accumulation.
    h1 = jnp.dot(x_ref[...], w1_ref[...], preferred_element_type=jnp.float32)
    h1 = jnp.maximum(h1 + b1_ref[...], 0.0)           # f32 bias + ReLU on VPU
    # Layer 2: (TILE_B, 50) @ (50, 20) -- bf16 MXU operands, f32 accumulation.
    h2 = jnp.dot(h1.astype(jnp.bfloat16), w2_ref[...],
                 preferred_element_type=jnp.float32)
    h2 = jnp.maximum(h2 + b2_ref[...], 0.0)
    # Layer 3: Linear(20, 1) as an NT matmul producing a lane-dense row:
    #   (1, 20) . (TILE_B, 20)^T -> (1, TILE_B).  K=20, so f32 cost is trivial
    # and keeps full precision; the result lands batch-major along lanes so the
    # output store is an unmasked, contiguous vst + contiguous DMA writeback.
    out_row = lax.dot_general(w3_ref[...], h2,
                              dimension_numbers=_TRANS_B_DIM_NUMBERS,
                              preferred_element_type=jnp.float32)
    o_ref[...] = out_row + b3_ref[...]


def _round_up(x, m):
    return ((x + m - 1) // m) * m


def critic_forward(x, params, *, block_b=1024):
    """Fused 3-layer MLP on TPU via a single batch-gridded Pallas kernel.

    x: [B, fet_size] float32 (cast to bf16 for the MXU inside the wrapper)
    params: dict with w1 [F,50], b1 [1,50], w2 [50,20], b2 [1,20],
            w3 [20,1], b3 [1,1]   (y = x @ W + b layout, i.e. PyTorch W^T)
    returns: [B, 1] float32
    """
    B, F = x.shape

    # Tile size: multiple of 8 sublanes; don't over-pad tiny batches.
    tile_b = min(block_b, _round_up(B, 8))
    b_pad = _round_up(B, tile_b)
    grid = (b_pad // tile_b,)

    # bf16 MXU operands (halves HBM traffic for x, the only large operand).
    x_bf16 = x.astype(jnp.bfloat16)
    if b_pad != B:
        x_bf16 = jnp.pad(x_bf16, ((0, b_pad - B), (0, 0)))
    w1 = params["w1"].astype(jnp.bfloat16)
    w2 = params["w2"].astype(jnp.bfloat16)
    b1 = params["b1"].astype(jnp.float32)
    b2 = params["b2"].astype(jnp.float32)
    w3_row = params["w3"].reshape(1, 20).astype(jnp.float32)
    b3 = params["b3"].reshape(1, 1).astype(jnp.float32)

    const = lambda i: (0, 0)  # weights/biases: resident, DMA'd once
    in_specs = [
        pl.BlockSpec((tile_b, F), lambda i: (i, 0)),   # x tile (pipelined)
        pl.BlockSpec((F, 50), const),                  # w1
        pl.BlockSpec((1, 50), const),                  # b1
        pl.BlockSpec((50, 20), const),                 # w2
        pl.BlockSpec((1, 20), const),                  # b2
        pl.BlockSpec((1, 20), const),                  # w3 (as row)
        pl.BlockSpec((1, 1), const),                   # b3
    ]
    # Output stored batch-major along lanes: [1, B_pad] in HBM, one (1, tile_b)
    # lane-dense row per grid step.
    out_specs = pl.BlockSpec((1, tile_b), lambda i: (0, i))

    flops = 2 * b_pad * (F * 50 + 50 * 20 + 20)
    bytes_accessed = (b_pad * F * 2 + b_pad * 4 +
                      (F * 50 + 50 * 20 + 20) * 2 + (50 + 20 + 1) * 4)

    out = pl.pallas_call(
        critic_kernel,
        out_shape=jax.ShapeDtypeStruct((1, b_pad), jnp.float32),
        grid=grid,
        in_specs=in_specs,
        out_specs=out_specs,
        compiler_params=pltpu.CompilerParams(
            dimension_semantics=("parallel",)),
        cost_estimate=pl.CostEstimate(
            flops=flops, transcendentals=0, bytes_accessed=bytes_accessed),
    )(x_bf16, w1, b1, w2, b2, w3_row, b3)

    # (1, B_pad) row-major == (B_pad, 1) contiguous; reshape is free.
    return out.reshape(b_pad, 1)[:B]


def init_params(key, fet_size):
    """Deterministic synthetic initialization (PyTorch Linear-style uniform)."""
    ks = jax.random.split(key, 6)

    def linear_init(kw, kb, fan_in, fan_out):
        bound = 1.0 / jnp.sqrt(jnp.float32(fan_in))
        w = jax.random.uniform(kw, (fan_in, fan_out), jnp.float32, -bound, bound)
        b = jax.random.uniform(kb, (1, fan_out), jnp.float32, -bound, bound)
        return w, b

    w1, b1 = linear_init(ks[0], ks[1], fet_size, 50)
    w2, b2 = linear_init(ks[2], ks[3], 50, 20)
    w3, b3 = linear_init(ks[4], ks[5], 20, 1)
    return {"w1": w1, "b1": b1, "w2": w2, "b2": b2, "w3": w3, "b3": b3}


def critic_reference(x, p):
    h1 = jnp.maximum(x @ p["w1"] + p["b1"], 0.0)
    h2 = jnp.maximum(h1 @ p["w2"] + p["b2"], 0.0)
    return h2 @ p["w3"] + p["b3"]


if __name__ == "__main__":
    key = jax.random.PRNGKey(0)
    k_x, k_p, k_x2 = jax.random.split(key, 3)

    fet_size = 32  # opt.fet_size
    params = init_params(k_p, fet_size)

    # Small batch (matches typical module usage): single grid step.
    batch = 8
    x = jax.random.normal(k_x, (batch, fet_size), dtype=jnp.float32)
    out = jax.block_until_ready(critic_forward(x, params))
    ref = critic_reference(x, params)
    assert out.shape == (batch, 1)
    # bf16 MXU inputs with f32 accumulation -> loosened tolerance vs f32 ref.
    assert jnp.allclose(out, ref, atol=2e-2, rtol=2e-2)

    # Larger batch with a smaller block to exercise the multi-tile pipelined
    # grid (4 steps @ 256) and the lane-dense (1, 256) output blocking.
    batch2 = 1024
    x2 = jax.random.normal(k_x2, (batch2, fet_size), dtype=jnp.float32)
    out2 = jax.block_until_ready(critic_forward(x2, params, block_b=256))
    ref2 = critic_reference(x2, params)
    assert out2.shape == (batch2, 1)
    assert jnp.allclose(out2, ref2, atol=2e-2, rtol=2e-2)

    print("KERNEL_OK")
</pallas_src>

<mosaic_0001>
module attributes {stable_mosaic.version = 11 : i64} {
  func.func @critic_kernel(%arg0: i32, %arg1: memref<8x32xbf16, #tpu.memory_space<vmem>>, %arg2: memref<32x50xbf16, #tpu.memory_space<vmem>>, %arg3: memref<1x50xf32, #tpu.memory_space<vmem>>, %arg4: memref<50x20xbf16, #tpu.memory_space<vmem>>, %arg5: memref<1x20xf32, #tpu.memory_space<vmem>>, %arg6: memref<1x20xf32, #tpu.memory_space<vmem>>, %arg7: memref<1x1xf32, #tpu.memory_space<vmem>>, %arg8: memref<1x8xf32, #tpu.memory_space<vmem>>) attributes {dimension_semantics = [#tpu.dimension_semantics<parallel>], iteration_bounds = array<i64: 1>, scalar_prefetch = 0 : i64, scratch_operands = 0 : i64, tpu.core_type = #tpu.core_type<tc>, window_params = [{transform_indices = @transform_0, window_bounds = array<i64: 8, 32>}, {pipeline_mode = #tpu.pipeline_mode<synchronous>, transform_indices = @transform_1, window_bounds = array<i64: 32, 50>}, {pipeline_mode = #tpu.pipeline_mode<synchronous>, transform_indices = @transform_2, window_bounds = array<i64: 1, 50>}, {pipeline_mode = #tpu.pipeline_mode<synchronous>, transform_indices = @transform_3, window_bounds = array<i64: 50, 20>}, {pipeline_mode = #tpu.pipeline_mode<synchronous>, transform_indices = @transform_4, window_bounds = array<i64: 1, 20>}, {pipeline_mode = #tpu.pipeline_mode<synchronous>, transform_indices = @transform_5, window_bounds = array<i64: 1, 20>}, {pipeline_mode = #tpu.pipeline_mode<synchronous>, transform_indices = @transform_6, window_bounds = array<i64: 1, 1>}, {transform_indices = @transform_7, window_bounds = array<i64: 1, 8>}]} {
    %c0 = arith.constant 0 : index
    %c0_0 = arith.constant 0 : index
    %0 = vector.load %arg1[%c0, %c0_0] : memref<8x32xbf16, #tpu.memory_space<vmem>>, vector<8x32xbf16>
    %c0_1 = arith.constant 0 : index
    %c0_2 = arith.constant 0 : index
    %1 = vector.load %arg2[%c0_1, %c0_2] : memref<32x50xbf16, #tpu.memory_space<vmem>>, vector<32x50xbf16>
    %cst = arith.constant dense<0.000000e+00> : vector<8x50xf32>
    %2 = tpu.matmul %0, %1, %cst {dimension_numbers = #tpu.dot_dimension_numbers<[1], [0], [0], [1], [0, 0, 1, 1], [], []>} : vector<8x32xbf16>, vector<32x50xbf16>, vector<8x50xf32> -> vector<8x50xf32>
    %c0_3 = arith.constant 0 : index
    %c0_4 = arith.constant 0 : index
    %3 = vector.load %arg3[%c0_3, %c0_4] : memref<1x50xf32, #tpu.memory_space<vmem>>, vector<1x50xf32>
    %4 = vector.broadcast %3 : vector<1x50xf32> to vector<8x50xf32>
    %5 = arith.addf %2, %4 : vector<8x50xf32>
    %cst_5 = arith.constant 0.000000e+00 : f32
    %6 = vector.broadcast %cst_5 : f32 to vector<8x50xf32>
    %7 = arith.maximumf %5, %6 : vector<8x50xf32>
    %8 = arith.truncf %7 : vector<8x50xf32> to vector<8x50xbf16>
    %c0_6 = arith.constant 0 : index
    %c0_7 = arith.constant 0 : index
    %9 = vector.load %arg4[%c0_6, %c0_7] : memref<50x20xbf16, #tpu.memory_space<vmem>>, vector<50x20xbf16>
    %cst_8 = arith.constant dense<0.000000e+00> : vector<8x20xf32>
    %10 = tpu.matmul %8, %9, %cst_8 {dimension_numbers = #tpu.dot_dimension_numbers<[1], [0], [0], [1], [0, 0, 1, 1], [], []>} : vector<8x50xbf16>, vector<50x20xbf16>, vector<8x20xf32> -> vector<8x20xf32>
    %c0_9 = arith.constant 0 : index
    %c0_10 = arith.constant 0 : index
    %11 = vector.load %arg5[%c0_9, %c0_10] : memref<1x20xf32, #tpu.memory_space<vmem>>, vector<1x20xf32>
    %12 = vector.broadcast %11 : vector<1x20xf32> to vector<8x20xf32>
    %13 = arith.addf %10, %12 : vector<8x20xf32>
    %cst_11 = arith.constant 0.000000e+00 : f32
    %14 = vector.broadcast %cst_11 : f32 to vector<8x20xf32>
    %15 = arith.maximumf %13, %14 : vector<8x20xf32>
    %c0_12 = arith.constant 0 : index
    %c0_13 = arith.constant 0 : index
    %16 = vector.load %arg6[%c0_12, %c0_13] : memref<1x20xf32, #tpu.memory_space<vmem>>, vector<1x20xf32>
    %cst_14 = arith.constant dense<0.000000e+00> : vector<1x8xf32>
    %17 = tpu.matmul %16, %15, %cst_14 {dimension_numbers = #tpu.dot_dimension_numbers<[1], [1], [0], [0], [0, 0, 1, 0], [], []>} : vector<1x20xf32>, vector<8x20xf32>, vector<1x8xf32> -> vector<1x8xf32>
    %c0_15 = arith.constant 0 : index
    %c0_16 = arith.constant 0 : index
    %18 = vector.load %arg7[%c0_15, %c0_16] : memref<1x1xf32, #tpu.memory_space<vmem>>, vector<1x1xf32>
    %19 = vector.broadcast %18 : vector<1x1xf32> to vector<1x8xf32>
    %20 = arith.addf %17, %19 : vector<1x8xf32>
    %c0_17 = arith.constant 0 : index
    %c0_18 = arith.constant 0 : index
    %21 = vector.load %arg8[%c0_17, %c0_18] : memref<1x8xf32, #tpu.memory_space<vmem>>, vector<1x8xf32>
    tpu.vector_store %arg8[%c0_17, %c0_18], %20 {strides = array<i32>} : memref<1x8xf32, #tpu.memory_space<vmem>>, vector<1x8xf32>,
    return
  }
  func.func @transform_0(%arg0: i32) -> (i32, i32) {
    %c0_i32 = arith.constant 0 : i32
    %c0_i32_0 = arith.constant 0 : i32
    return %arg0, %c0_i32 : i32, i32
  }
  func.func @transform_1(%arg0: i32) -> (i32, i32) {
    %c0_i32 = arith.constant 0 : i32
    %c0_i32_0 = arith.constant 0 : i32
    %c0_i32_1 = arith.constant 0 : i32
    return %c0_i32, %c0_i32_0 : i32, i32
  }
  func.func @transform_2(%arg0: i32) -> (i32, i32) {
    %c0_i32 = arith.constant 0 : i32
    %c0_i32_0 = arith.constant 0 : i32
    %c0_i32_1 = arith.constant 0 : i32
    return %c0_i32, %c0_i32_0 : i32, i32
  }
  func.func @transform_3(%arg0: i32) -> (i32, i32) {
    %c0_i32 = arith.constant 0 : i32
    %c0_i32_0 = arith.constant 0 : i32
    %c0_i32_1 = arith.constant 0 : i32
    return %c0_i32, %c0_i32_0 : i32, i32
  }
  func.func @transform_4(%arg0: i32) -> (i32, i32) {
    %c0_i32 = arith.constant 0 : i32
    %c0_i32_0 = arith.constant 0 : i32
    %c0_i32_1 = arith.constant 0 : i32
    return %c0_i32, %c0_i32_0 : i32, i32
  }
  func.func @transform_5(%arg0: i32) -> (i32, i32) {
    %c0_i32 = arith.constant 0 : i32
    %c0_i32_0 = arith.constant 0 : i32
    %c0_i32_1 = arith.constant 0 : i32
    return %c0_i32, %c0_i32_0 : i32, i32
  }
  func.func @transform_6(%arg0: i32) -> (i32, i32) {
    %c0_i32 = arith.constant 0 : i32
    %c0_i32_0 = arith.constant 0 : i32
    %c0_i32_1 = arith.constant 0 : i32
    return %c0_i32, %c0_i32_0 : i32, i32
  }
  func.func @transform_7(%arg0: i32) -> (i32, i32) {
    %c0_i32 = arith.constant 0 : i32
    %c0_i32_0 = arith.constant 0 : i32
    return %c0_i32, %arg0 : i32, i32
  }
}

</mosaic_0001>

<llo_original>
// kernel: tpu_custom_call.1
$region0: #{tpu_custom_call.1}
  #allocation0 [shape = 'u32[]', space=smem, size = 0x4, offset = 0x4, fixed_abs, tag = 'smem constant byte address 0x4 - core index']
  #allocation1 [shape = 'u32[72,128]{1,0:T(1,128)}', space=vmem, size = 0x9000, scoped, tag = 'internal scratch']
  #allocation2 [shape = 'f32[1,1]{1,0:T(1,128)S(1)}', space=vmem, size = 0x200, scoped, tag = 'scoped memory for tpu_custom_call.1']
  %s0 = inlined_call_operand.vmem [shape: bf16[8,32], index: 0, kind: input, shape index: {}]
  %s1 = inlined_call_operand.vmem [shape: bf16[32,50], index: 1, kind: input, shape index: {}]
  %s2 = inlined_call_operand.vmem [shape: f32[1,50], index: 2, kind: input, shape index: {}]
  %s3 = inlined_call_operand.vmem [shape: bf16[50,20], index: 3, kind: input, shape index: {}]
  %s4 = inlined_call_operand.vmem [shape: f32[1,20], index: 4, kind: input, shape index: {}]
  %s5 = inlined_call_operand.vmem [shape: f32[1,20], index: 5, kind: input, shape index: {}]
  %s6 = inlined_call_operand.<no memory space> [shape: f32[1,1], index: 6, kind: input, shape index: {}]
  %s7 = inlined_call_operand.hbm [shape: f32[1,8], index: 7, kind: output, shape index: {}]
  %s8 = sld [smem:[#allocation0]]
  $region38: #{tpu_custom_call.1} parent=0
    _
  %s10 = ssub.s32 1, %s8
  %s11 = scalar_select 0, %s10, %s8
  %v12 = vstv %s6
  %13 = vst [vmem:[#allocation2] sm:$0x1] %v12
  $region1: #{tpu_custom_call.1} parent=0
    #allocation3 [shape = 'u8[512]{0}', space=vmem, size = 0x400, scoped, tag = 'output window, operand 0, single buffered']
    #allocation4 [shape = 's32[1]{0}', space=sflag, size = 0x4, scoped, tag = 'scoped memory for tpu_custom_call.1']
    %14 = vsyncpa [#allocation4], 0
    // Predicated region
    $region2: #{tpu_custom_call.1} parent=1 // pred_check
      _
    $region3: #{tpu_custom_call.1} parent=1 // pred_check_branch
      %16 = sbr.rel (0) target = $region5
    $region4: #{tpu_custom_call.1} parent=1 // pred_region
      _
    $region5: #{tpu_custom_call.1} parent=1 // pred_fallthru
      _
    // Predicated region
    $region6: #{tpu_custom_call.1} parent=1 // pred_check
      _
    $region7: #{tpu_custom_call.1} parent=1 // pred_check_branch
      %18 = sbr.rel (0) target = $region9
    $region8: #{tpu_custom_call.1} parent=1 // pred_region
      _
    $region9: #{tpu_custom_call.1} parent=1 // pred_fallthru
      _
    // Predicated region
    $region10: #{tpu_custom_call.1} parent=1 // pred_check
      _
    $region11: #{tpu_custom_call.1} parent=1 // pred_check_branch
      %20 = sbr.rel (0) target = $region13
    $region12: #{tpu_custom_call.1} parent=1 // pred_region
      _
    $region13: #{tpu_custom_call.1} parent=1 // pred_fallthru
      _
    // Predicated region
    $region14: #{tpu_custom_call.1} parent=1 // pred_check
      _
    $region15: #{tpu_custom_call.1} parent=1 // pred_check_branch
      %22 = sbr.rel (0) target = $region17
    $region16: #{tpu_custom_call.1} parent=1 // pred_region
      _
    $region17: #{tpu_custom_call.1} parent=1 // pred_fallthru
      _
    // Predicated region
    $region18: #{tpu_custom_call.1} parent=1 // pred_check
      _
    $region19: #{tpu_custom_call.1} parent=1 // pred_check_branch
      %24 = sbr.rel (0) target = $region21
    $region20: #{tpu_custom_call.1} parent=1 // pred_region
      _
    $region21: #{tpu_custom_call.1} parent=1 // pred_fallthru
      _
    // Predicated region
    $region22: #{tpu_custom_call.1} parent=1 // pred_check
      _
    $region23: #{tpu_custom_call.1} parent=1 // pred_check_branch
      %26 = sbr.rel (0) target = $region25
    $region24: #{tpu_custom_call.1} parent=1 // pred_region
      _
    $region25: #{tpu_custom_call.1} parent=1 // pred_fallthru
      _
    // Predicated region
    $region26: #{tpu_custom_call.1} parent=1 // pred_check
      _
    $region27: #{tpu_custom_call.1} parent=1 // pred_check_branch
      %28 = sbr.rel (0) target = $region29
    $region28: #{tpu_custom_call.1} parent=1 // pred_region
      _
    $region29: #{tpu_custom_call.1} parent=1 // pred_fallthru
      _
    %v30 = vld [vmem:[%s0] sm:$0xf]
    %v31 = vld [vmem:[%s1] sm:$0xf]
    %v32 = vld [vmem:[%s1 + $0x4] sm:$0xf]
    %v33 = vld [vmem:[%s1 + $0x8] sm:$0xf]
    %v34 = vld [vmem:[%s1 + $0xc] sm:$0xf]
    %v35 = vld [vmem:[%s2] sm:$0x1]
    %v37 = vperm.slane %v35, 0
    %v43 = vunpack.c.l.b16 %v31
    %v44 = vunpack.c.l.b16 %v32
    %v45 = vunpack.c.l.b16 %v33
    %v46 = vunpack.c.l.b16 %v34
    %v47 = vpack.c.b16 %v44, %v43
    %v48 = vpack.c.b16 %v46, %v45
    %vm51 = vcmask 261120
    %v53 = vsel %vm51, %v30, 0
    %55 = vmatpush.bf16.msra.mxu0 0
    %56 = vmatpush.bf16.msra.mxu0 0
    %57 = vmatpush.bf16.msra.mxu0 0
    %58 = vmatpush.bf16.msra.mxu0 0
    %59 = vmatpush.bf16.msra.mxu0 0
    %60 = vmatpush.bf16.msra.mxu0 0
    %61 = vmatpush.bf16.msra.mxu0 %v48
    %62 = vmatpush.bf16.msra.mxu0 %v47
    %63 = vmatmul.bf16.gmra.mxu0 %v53
    %v64 = vpop.f32.mrf.mxu0
    %v65 = vadd.f32 %v37, %v64
    %v66 = vpop.f32.mrf.mxu0
    %67 = vdwg.mxu0
    %v68 = vmax.f32 %v65, 0.0
    %v69 = vpack.c.bf16 %v68, %v68
    %v70 = vld [vmem:[%s3] sm:$0xf]
    %v71 = vld [vmem:[%s3 + $0x4] sm:$0xf]
    %v72 = vld [vmem:[%s3 + $0x8] sm:$0xf]
    %v73 = vld [vmem:[%s3 + $0xc] sm:$0xf]
    %v74 = vld [vmem:[%s3 + $0x10] sm:$0xf]
    %v75 = vld [vmem:[%s3 + $0x14] sm:$0xf]
    %v76 = vld [vmem:[%s3 + $0x18] sm:$0x1]
    %v77 = vld [vmem:[%s4] sm:$0x1]
    %v79 = vperm.slane %v77, 0
    %v88 = vunpack.c.l.b16 %v70
    %v89 = vunpack.c.l.b16 %v71
    %v90 = vunpack.c.l.b16 %v72
    %v91 = vunpack.c.l.b16 %v73
    %v92 = vunpack.c.l.b16 %v74
    %v93 = vunpack.c.l.b16 %v75
    %v94 = vunpack.c.l.b16 %v76
    %v95 = vpack.c.b16 %v89, %v88
    %v96 = vpack.c.b16 %v91, %v90
    %v97 = vpack.c.b16 %v93, %v92
    %v98 = vpack.c.b16 %v94, %v94
    %vm102 = vcmask 408576
    %v104 = vsel %vm102, %v69, 0
    %vm106 = vcmask 1040384
    %v108 = vsel %vm106, %v98, 0
    %110 = vmatpush.bf16.msra.mxu0 0
    %111 = vmatpush.bf16.msra.mxu0 0
    %112 = vmatpush.bf16.msra.mxu0 0
    %113 = vmatpush.bf16.msra.mxu0 0
    %114 = vmatpush.bf16.msra.mxu0 %v108
    %115 = vmatpush.bf16.msra.mxu0 %v97
    %116 = vmatpush.bf16.msra.mxu0 %v96
    %117 = vmatpush.bf16.msra.mxu0 %v95
    %118 = vmatmul.bf16.gmra.mxu0 %v104
    %v119 = vpop.f32.mrf.mxu0
    %v120 = vadd.f32 %v79, %v119
    %v121 = vpop.f32.mrf.mxu0
    %122 = vdwg.mxu0
    %v123 = vmax.f32 %v120, 0.0
    %v124 = vld [vmem:[%s5] sm:$0x1]
    %v125 = vld [vmem:[#allocation2] sm:$0x1]
    %127 = vset.pattern.permute.xlu0 0
    %128 = vperm.xlu0 %127, %v125
    %v129 = vpop.permute.xlu0 %128
    %v131 = vperm.slane %v129, 0
    %vm132 = vcmask 162816
    %v134 = vsel %vm132, %v124, 0
    %v137 = vsel %vm132, %v123, 0
    %139 = vmatpush.xpose.msra.mxu0 0.0
    %140 = vmatpush.xpose.msra.mxu0 0.0
    %141 = vmatpush.xpose.msra.mxu0 0.0
    %142 = vmatpush.xpose.msra.mxu0 0.0
    %143 = vmatpush.xpose.msra.mxu0 0.0
    %144 = vmatpush.xpose.msra.mxu0 0.0
    %145 = vmatpush.xpose.msra.mxu0 0.0
    %146 = vmatpush.xpose.msra.mxu0 0.0
    %147 = vmatpush.xpose.msra.mxu0 0.0
    %148 = vmatpush.xpose.msra.mxu0 0.0
    %149 = vmatpush.xpose.msra.mxu0 0.0
    %150 = vmatpush.xpose.msra.mxu0 0.0
    %151 = vmatpush.xpose.msra.mxu0 0.0
    %152 = vmatpush.xpose.msra.mxu0 0.0
    %153 = vmatpush.xpose.msra.mxu0 0.0
    %154 = vmatpush.xpose.msra.mxu0 %v137
    %155 = vmatmul.f32.gmra.mxu0 %v134
    %v156 = vpop.f32.mrf.mxu0
    %v157 = vadd.f32 %v131, %v156
    %158 = vdwg.mxu0
    %vm159 = vcmask 57344
    %160 = vst.msk [vmem:[#allocation3] sm:$0x1] %vm159, %v157
    // Predicated region
    $region30: #{tpu_custom_call.1} parent=1 // pred_check
      _
    $region31: #{tpu_custom_call.1} parent=1 // pred_check_branch
      %162 = sbr.rel (0) target = $region33
    $region32: #{tpu_custom_call.1} parent=1 // pred_region
      %164 = vsyncadd [#allocation4], 0
      %s166 = sshll.u32 [#allocation3], 4
      %s167 = int_to_ptr.vmem [resolvable:$true] %s166
      %s168 = sshll.u32 %s7, 4
      %s169 = int_to_ptr.hbm [resolvable:$true] %s168
      %171 = dma.vmem_to_hbm [thread:$0]  %s167, 16, %s169, [#allocation4]
    $region33: #{tpu_custom_call.1} parent=1 // pred_fallthru
      _
    // Predicated region
    $region34: #{tpu_custom_call.1} parent=1 // pred_check
      _
    $region35: #{tpu_custom_call.1} parent=1 // pred_check_branch
      %173 = sbr.rel (0) target = $region37
    $region36: #{tpu_custom_call.1} parent=1 // pred_region
      %175 = dma.done [#allocation4], 16
    $region37: #{tpu_custom_call.1} parent=1 // pred_fallthru
      _
    %176 = vsyncpa [#allocation4], 1

</llo_original>
